<compile_context>
chip_gen: v6e
topology: v6e:2x2x1
jax: 0.10.0
libtpu: 0.0.40
codegen_flags: <defaults>
</compile_context>

<pallas_src>
import functools

import numpy as np
import jax
import jax.numpy as jnp
from jax.experimental import pallas as pl
from jax.experimental.pallas import tpu as pltpu


def _round_up(x, m):
    return ((x + m - 1) // m) * m


def _choose_tile_hw(c, hw, itemsize):
    # ~3 MiB per logits pipeline buffer (double-buffered -> ~6 MiB live), which
    # fits the default scoped-VMEM limit on every generation (v5e 16 MiB,
    # v6e/v7x 32 MiB) for any class count, so no vmem_limit_bytes override is
    # needed.
    budget = 3 * 1024 * 1024
    t = budget // max(c * itemsize, 1)
    t = max(128, min(t, 65536))
    t = (t // 128) * 128
    t = min(t, _round_up(hw, 128))
    return max(t, 128)


def _make_kernel(c, tile_hw, hw, ignore_label, nll_thresh, ragged):
    def kernel(logits_ref, tgt_ref, nll_ref, part_ref):
        x = logits_ref[...].astype(jnp.float32)          # (c, tile_hw)
        t = tgt_ref[...]                                 # (1, tile_hw) int32
        valid = t != ignore_label
        if ragged:
            # Mask tail lanes of the last (partial) tile instead of padding
            # the logits in HBM.
            lane = jax.lax.broadcasted_iota(jnp.int32, t.shape, 1)
            valid = valid & ((pl.program_id(0) * tile_hw + lane) < hw)
        t_safe = jnp.where(valid, t, 0)

        cls = jax.lax.broadcasted_iota(jnp.int32, x.shape, 0)
        onehot = cls == t_safe                           # broadcast over C rows

        m = jnp.max(x, axis=0, keepdims=True)            # (1, tile_hw)
        e = jnp.exp(x - m)
        s = jnp.sum(e, axis=0, keepdims=True)
        x_gt = jnp.sum(jnp.where(onehot, x, 0.0), axis=0, keepdims=True)
        nll = (m - x_gt) + jnp.log(s)                    # -log softmax[gt]
        nll = jnp.where(valid, nll, 0.0)                 # invalid/tail -> prob 1
        nll_ref[...] = nll

        # Per-tile partial reductions (XLU/EUP slots are otherwise idle here).
        kept = valid & (nll >= nll_thresh)               # <=> prob <= thresh
        valid_cnt = jnp.sum(valid.astype(jnp.float32))
        kept_cnt = jnp.sum(kept.astype(jnp.float32))
        kept_sum = jnp.sum(jnp.where(kept, nll, 0.0))
        valid_sum = jnp.sum(nll)                         # invalid already zeroed
        row = jax.lax.broadcasted_iota(jnp.int32, (8, 128), 0)
        part_ref[...] = jnp.where(
            row == 0, valid_cnt,
            jnp.where(row == 1, kept_cnt,
                      jnp.where(row == 2, kept_sum,
                                jnp.where(row == 3, valid_sum, 0.0))))

    return kernel


@functools.partial(jax.jit, static_argnames=("ignore_label", "thresh", "min_kept"))
def prob_ohem_cross_entropy_2d(pred, target, *, ignore_label=255, thresh=0.6,
                               min_kept=256):
    """pred: (b, c, h, w) float logits (f32 or bf16, NCHW); target: (b, h, w) int."""
    b, c, h, w = pred.shape
    hw = h * w
    n = b * hw

    logits = pred.reshape(b, c, hw)                      # free view of NCHW
    tgt = target.reshape(b, 1, hw).astype(jnp.int32)

    tile_hw = _choose_tile_hw(c, hw, logits.dtype.itemsize)
    n_tiles = -(-hw // tile_hw)                          # cdiv; ragged tail OK
    ragged = (hw % tile_hw) != 0
    nll_thresh = float(-np.log(thresh))                  # prob <= thresh <=> nll >= this

    kernel = _make_kernel(c, tile_hw, hw, ignore_label, nll_thresh, ragged)

    nll, part = pl.pallas_call(
        kernel,
        out_shape=(
            jax.ShapeDtypeStruct((b, 1, hw), jnp.float32),
            jax.ShapeDtypeStruct((b * n_tiles, 8, 128), jnp.float32),
        ),
        grid_spec=pltpu.PrefetchScalarGridSpec(
            num_scalar_prefetch=0,
            grid=(n_tiles, b),                           # tile axis first: megacore
            in_specs=[
                pl.BlockSpec((None, c, tile_hw), lambda j, bi: (bi, 0, j)),
                pl.BlockSpec((None, 1, tile_hw), lambda j, bi: (bi, 0, j)),
            ],
            out_specs=[
                pl.BlockSpec((None, 1, tile_hw), lambda j, bi: (bi, 0, j)),
                pl.BlockSpec((None, 8, 128),
                             lambda j, bi: (bi * n_tiles + j, 0, 0)),
            ],
        ),
        compiler_params=pltpu.CompilerParams(
            dimension_semantics=("parallel", "parallel")),
    )(logits, tgt)

    valid_cnt = jnp.sum(part[:, 0, 0])
    kept_cnt = jnp.sum(part[:, 1, 0])
    kept_sum = jnp.sum(part[:, 2, 0])
    valid_sum = jnp.sum(part[:, 3, 0])

    if min_kept <= 0:
        # PyTorch never thresholds when min_kept == 0: plain mean over valid.
        return valid_sum / valid_cnt

    nll_flat = nll.reshape(-1)
    valid_flat = target.reshape(-1) != ignore_label

    def ohem(_):
        def common(_):
            # k-th smallest prob <= thresh  =>  threshold == thresh; the kernel
            # partials already hold sum/count over {valid & prob <= thresh}.
            return kept_sum / kept_cnt

        def rare(_):
            # k-th smallest prob > thresh: threshold is that prob.  k-th
            # smallest prob == exp(-(k-th largest nll)); invalid pixels carry
            # nll == 0 (prob 1), matching the reference's masked_fill_(1).
            kk = min(n, min_kept)
            top_nll, _ = jax.lax.top_k(nll_flat, kk)
            thr_nll = jnp.minimum(top_nll[kk - 1], nll_thresh)  # max(prob, thresh)
            keep = valid_flat & (nll_flat >= thr_nll)
            s = jnp.sum(jnp.where(keep, nll_flat, 0.0))
            cnt = jnp.sum(keep.astype(jnp.float32))
            return s / cnt

        return jax.lax.cond(kept_cnt >= min_kept, common, rare, None)

    def no_ohem(_):
        # min_kept > num_valid (or no valid pixels): plain mean over valid
        # pixels; 0/0 -> NaN matches torch CE over an all-ignored target.
        return valid_sum / valid_cnt

    apply_ohem = (valid_cnt >= min_kept) & (valid_cnt > 0)
    return jax.lax.cond(apply_ohem, ohem, no_ohem, None)


def _reference(pred, target, ignore_label=255, thresh=0.6, min_kept=256):
    """Pure numpy mirror of the PyTorch module (f64)."""
    pred = np.asarray(pred, dtype=np.float64)
    target = np.asarray(target).reshape(-1)
    b, c, h, w = pred.shape
    valid = target != ignore_label
    num_valid = int(valid.sum())
    logits = np.moveaxis(pred, 1, -1).reshape(-1, c)
    z = logits - logits.max(axis=1, keepdims=True)
    prob = np.exp(z) / np.exp(z).sum(axis=1, keepdims=True)
    t_safe = np.where(valid, target, 0)
    gt_prob = prob[np.arange(target.size), t_safe]
    nll = -np.log(gt_prob)
    keep = valid.copy()
    if min_kept <= num_valid and num_valid > 0 and min_kept > 0:
        mask_prob = np.where(valid, gt_prob, 1.0)
        kth = np.sort(mask_prob)[min(mask_prob.size, min_kept) - 1]
        threshold = kth if kth > thresh else thresh
        keep = valid & (mask_prob <= threshold)
    if keep.sum() == 0:
        return float("nan")
    return float(nll[keep].mean())


if __name__ == "__main__":
    key = jax.random.PRNGKey(0)
    kp, kt, km = jax.random.split(key, 3)

    # Case 1: common OHEM path (threshold == thresh, no top_k executed).
    B, C, H, W = 2, 19, 16, 16
    pred = jax.random.normal(kp, (B, C, H, W), dtype=jnp.float32)
    labels = jax.random.randint(kt, (B, H, W), 0, C, dtype=jnp.int32)
    ignore = jax.random.uniform(km, (B, H, W)) < 0.1
    target = jnp.where(ignore, 255, labels).astype(jnp.int32)

    loss1 = prob_ohem_cross_entropy_2d(pred, target)
    jax.block_until_ready(loss1)
    np.testing.assert_allclose(float(loss1), _reference(pred, target),
                               rtol=5e-3, atol=1e-3)

    # Case 2: rare path (k-th smallest gt-prob > thresh -> top_k branch).
    boost = jnp.moveaxis(jax.nn.one_hot(labels, C, dtype=jnp.float32), -1, 1) * 6.0
    pred2 = pred + boost
    loss2 = prob_ohem_cross_entropy_2d(pred2, target, min_kept=200)
    jax.block_until_ready(loss2)
    np.testing.assert_allclose(float(loss2), _reference(pred2, target, min_kept=200),
                               rtol=5e-3, atol=1e-3)

    # Case 3: no-OHEM path (min_kept > num_valid) + ragged h*w (15*17 = 255),
    # exercising the unpadded tail handling.
    B3, C3, H3, W3 = 1, 7, 15, 17
    k1, k2, k3 = jax.random.split(jax.random.PRNGKey(1), 3)
    pred3 = jax.random.normal(k1, (B3, C3, H3, W3), dtype=jnp.float32)
    labels3 = jax.random.randint(k2, (B3, H3, W3), 0, C3, dtype=jnp.int32)
    ignore3 = jax.random.uniform(k3, (B3, H3, W3)) < 0.1
    target3 = jnp.where(ignore3, 255, labels3).astype(jnp.int32)
    loss3 = prob_ohem_cross_entropy_2d(pred3, target3, min_kept=10000)
    jax.block_until_ready(loss3)
    np.testing.assert_allclose(float(loss3), _reference(pred3, target3, min_kept=10000),
                               rtol=5e-3, atol=1e-3)

    assert np.isfinite(float(loss1)) and np.isfinite(float(loss2)) and np.isfinite(float(loss3))
    print("KERNEL_OK")
</pallas_src>

<mosaic_0001>
module attributes {stable_mosaic.version = 11 : i64} {
  func.func @kernel(%arg0: i32, %arg1: i32, %arg2: memref<1x19x256xf32, #tpu.memory_space<vmem>>, %arg3: memref<1x1x256xi32, #tpu.memory_space<vmem>>, %arg4: memref<1x1x256xf32, #tpu.memory_space<vmem>>, %arg5: memref<1x8x128xf32, #tpu.memory_space<vmem>>) attributes {dimension_semantics = [#tpu.dimension_semantics<parallel>, #tpu.dimension_semantics<parallel>], iteration_bounds = array<i64: 1, 2>, scalar_prefetch = 0 : i64, scratch_operands = 0 : i64, tpu.core_type = #tpu.core_type<tc>, window_params = [{transform_indices = @transform_0, window_bounds = array<i64: 1, 19, 256>}, {transform_indices = @transform_1, window_bounds = array<i64: 1, 1, 256>}, {transform_indices = @transform_2, window_bounds = array<i64: 1, 1, 256>}, {transform_indices = @transform_3, window_bounds = array<i64: 1, 8, 128>}]} {
    %c0 = arith.constant 0 : index
    %c0_0 = arith.constant 0 : index
    %c0_1 = arith.constant 0 : index
    %0 = vector.load %arg2[%c0, %c0_0, %c0_1] : memref<1x19x256xf32, #tpu.memory_space<vmem>>, vector<1x19x256xf32>
    %1 = vector.shape_cast %0 : vector<1x19x256xf32> to vector<19x256xf32>
    %c0_2 = arith.constant 0 : index
    %c0_3 = arith.constant 0 : index
    %c0_4 = arith.constant 0 : index
    %2 = vector.load %arg3[%c0_2, %c0_3, %c0_4] : memref<1x1x256xi32, #tpu.memory_space<vmem>>, vector<1x1x256xi32>
    %3 = vector.shape_cast %2 : vector<1x1x256xi32> to vector<1x256xi32>
    %c255_i32 = arith.constant 255 : i32
    %4 = vector.broadcast %c255_i32 : i32 to vector<1x256xi32>
    %5 = arith.cmpi ne, %3, %4 : vector<1x256xi32>
    %c0_i32 = arith.constant 0 : i32
    %6 = vector.broadcast %c0_i32 : i32 to vector<1x256xi32>
    %7 = arith.select %5, %3, %6 : vector<1x256xi1>, vector<1x256xi32>
    %8 = tpu.iota {dimensions = array<i32: 0>} : vector<19x256xi32>
    %9 = vector.broadcast %7 : vector<1x256xi32> to vector<19x256xi32>
    %10 = arith.cmpi eq, %8, %9 : vector<19x256xi32>
    %cst = arith.constant dense<0xFF800000> : vector<256xf32>
    %11 = vector.multi_reduction <maximumf>, %1, %cst [0] : vector<19x256xf32> to vector<256xf32>
    %12 = vector.shape_cast %11 : vector<256xf32> to vector<1x256xf32>
    %13 = vector.broadcast %12 : vector<1x256xf32> to vector<19x256xf32>
    %14 = arith.subf %1, %13 : vector<19x256xf32>
    %15 = math.exp %14 : vector<19x256xf32>
    %cst_5 = arith.constant dense<0.000000e+00> : vector<256xf32>
    %16 = vector.multi_reduction <add>, %15, %cst_5 [0] : vector<19x256xf32> to vector<256xf32>
    %17 = vector.shape_cast %16 : vector<256xf32> to vector<1x256xf32>
    %cst_6 = arith.constant 0.000000e+00 : f32
    %18 = vector.broadcast %cst_6 : f32 to vector<19x256xf32>
    %19 = arith.select %10, %1, %18 : vector<19x256xi1>, vector<19x256xf32>
    %cst_7 = arith.constant dense<0.000000e+00> : vector<256xf32>
    %20 = vector.multi_reduction <add>, %19, %cst_7 [0] : vector<19x256xf32> to vector<256xf32>
    %21 = vector.shape_cast %20 : vector<256xf32> to vector<1x256xf32>
    %22 = arith.subf %12, %21 : vector<1x256xf32>
    %23 = math.log %17 : vector<1x256xf32>
    %24 = arith.addf %22, %23 : vector<1x256xf32>
    %cst_8 = arith.constant 0.000000e+00 : f32
    %25 = vector.broadcast %cst_8 : f32 to vector<1x256xf32>
    %26 = arith.select %5, %24, %25 : vector<1x256xi1>, vector<1x256xf32>
    %c0_9 = arith.constant 0 : index
    %c0_10 = arith.constant 0 : index
    %c0_11 = arith.constant 0 : index
    %27 = vector.load %arg4[%c0_9, %c0_10, %c0_11] : memref<1x1x256xf32, #tpu.memory_space<vmem>>, vector<1x1x256xf32>
    %28 = vector.shape_cast %27 : vector<1x1x256xf32> to vector<1x256xf32>
    %29 = vector.shape_cast %26 : vector<1x256xf32> to vector<1x1x256xf32>
    tpu.vector_store %arg4[%c0_9, %c0_10, %c0_11], %29 {strides = array<i32>} : memref<1x1x256xf32, #tpu.memory_space<vmem>>, vector<1x1x256xf32>,
    %cst_12 = arith.constant 0.510825634 : f32
    %30 = vector.broadcast %cst_12 : f32 to vector<1x256xf32>
    %31 = arith.cmpf oge, %26, %30 : vector<1x256xf32>
    %32 = arith.andi %5, %31 : vector<1x256xi1>
    %33 = arith.extui %5 : vector<1x256xi1> to vector<1x256xi32>
    %34 = arith.sitofp %33 : vector<1x256xi32> to vector<1x256xf32>
    %35 = vector.shape_cast %34 : vector<1x256xf32> to vector<1x1x256xf32>
    %cst_13 = arith.constant dense<0.000000e+00> : vector<1xf32>
    %36 = vector.multi_reduction <add>, %35, %cst_13 [1, 2] : vector<1x1x256xf32> to vector<1xf32>
    %37 = vector.shape_cast %36 : vector<1xf32> to vector<1x1x1xf32>
    %38 = vector.extract %37[0, 0, 0] : f32 from vector<1x1x1xf32>
    %39 = arith.extui %32 : vector<1x256xi1> to vector<1x256xi32>
    %40 = arith.sitofp %39 : vector<1x256xi32> to vector<1x256xf32>
    %41 = vector.shape_cast %40 : vector<1x256xf32> to vector<1x1x256xf32>
    %cst_14 = arith.constant dense<0.000000e+00> : vector<1xf32>
    %42 = vector.multi_reduction <add>, %41, %cst_14 [1, 2] : vector<1x1x256xf32> to vector<1xf32>
    %43 = vector.shape_cast %42 : vector<1xf32> to vector<1x1x1xf32>
    %44 = vector.extract %43[0, 0, 0] : f32 from vector<1x1x1xf32>
    %cst_15 = arith.constant 0.000000e+00 : f32
    %45 = vector.broadcast %cst_15 : f32 to vector<1x256xf32>
    %46 = arith.select %32, %26, %45 : vector<1x256xi1>, vector<1x256xf32>
    %47 = vector.shape_cast %46 : vector<1x256xf32> to vector<1x1x256xf32>
    %cst_16 = arith.constant dense<0.000000e+00> : vector<1xf32>
    %48 = vector.multi_reduction <add>, %47, %cst_16 [1, 2] : vector<1x1x256xf32> to vector<1xf32>
    %49 = vector.shape_cast %48 : vector<1xf32> to vector<1x1x1xf32>
    %50 = vector.extract %49[0, 0, 0] : f32 from vector<1x1x1xf32>
    %51 = vector.shape_cast %26 : vector<1x256xf32> to vector<1x1x256xf32>
    %cst_17 = arith.constant dense<0.000000e+00> : vector<1xf32>
    %52 = vector.multi_reduction <add>, %51, %cst_17 [1, 2] : vector<1x1x256xf32> to vector<1xf32>
    %53 = vector.shape_cast %52 : vector<1xf32> to vector<1x1x1xf32>
    %54 = vector.extract %53[0, 0, 0] : f32 from vector<1x1x1xf32>
    %55 = tpu.iota {dimensions = array<i32: 0>} : vector<8x128xi32>
    %c0_i32_18 = arith.constant 0 : i32
    %56 = vector.broadcast %c0_i32_18 : i32 to vector<8x128xi32>
    %57 = arith.cmpi eq, %55, %56 : vector<8x128xi32>
    %c1_i32 = arith.constant 1 : i32
    %58 = vector.broadcast %c1_i32 : i32 to vector<8x128xi32>
    %59 = arith.cmpi eq, %55, %58 : vector<8x128xi32>
    %c2_i32 = arith.constant 2 : i32
    %60 = vector.broadcast %c2_i32 : i32 to vector<8x128xi32>
    %61 = arith.cmpi eq, %55, %60 : vector<8x128xi32>
    %c3_i32 = arith.constant 3 : i32
    %62 = vector.broadcast %c3_i32 : i32 to vector<8x128xi32>
    %63 = arith.cmpi eq, %55, %62 : vector<8x128xi32>
    %cst_19 = arith.constant 0.000000e+00 : f32
    %64 = vector.broadcast %54 : f32 to vector<8x128xf32>
    %65 = vector.broadcast %cst_19 : f32 to vector<8x128xf32>
    %66 = arith.select %63, %64, %65 : vector<8x128xi1>, vector<8x128xf32>
    %67 = vector.broadcast %50 : f32 to vector<8x128xf32>
    %68 = arith.select %61, %67, %66 : vector<8x128xi1>, vector<8x128xf32>
    %69 = vector.broadcast %44 : f32 to vector<8x128xf32>
    %70 = arith.select %59, %69, %68 : vector<8x128xi1>, vector<8x128xf32>
    %71 = vector.broadcast %38 : f32 to vector<8x128xf32>
    %72 = arith.select %57, %71, %70 : vector<8x128xi1>, vector<8x128xf32>
    %c0_20 = arith.constant 0 : index
    %c0_21 = arith.constant 0 : index
    %c0_22 = arith.constant 0 : index
    %73 = vector.load %arg5[%c0_20, %c0_21, %c0_22] : memref<1x8x128xf32, #tpu.memory_space<vmem>>, vector<1x8x128xf32>
    %74 = vector.shape_cast %73 : vector<1x8x128xf32> to vector<8x128xf32>
    %75 = vector.shape_cast %72 : vector<8x128xf32> to vector<1x8x128xf32>
    tpu.vector_store %arg5[%c0_20, %c0_21, %c0_22], %75 {strides = array<i32>} : memref<1x8x128xf32, #tpu.memory_space<vmem>>, vector<1x8x128xf32>,
    return
  }
  func.func @transform_0(%arg0: i32, %arg1: i32) -> (i32, i32, i32) {
    %c0_i32 = arith.constant 0 : i32
    %c0_i32_0 = arith.constant 0 : i32
    return %arg1, %c0_i32, %arg0 : i32, i32, i32
  }
  func.func @transform_1(%arg0: i32, %arg1: i32) -> (i32, i32, i32) {
    %c0_i32 = arith.constant 0 : i32
    %c0_i32_0 = arith.constant 0 : i32
    return %arg1, %c0_i32, %arg0 : i32, i32, i32
  }
  func.func @transform_2(%arg0: i32, %arg1: i32) -> (i32, i32, i32) {
    %c0_i32 = arith.constant 0 : i32
    %c0_i32_0 = arith.constant 0 : i32
    return %arg1, %c0_i32, %arg0 : i32, i32, i32
  }
  func.func @transform_3(%arg0: i32, %arg1: i32) -> (i32, i32, i32) {
    %c1_i32 = arith.constant 1 : i32
    %0 = arith.muli %arg1, %c1_i32 : i32
    %1 = arith.addi %0, %arg0 : i32
    %c0_i32 = arith.constant 0 : i32
    %c0_i32_0 = arith.constant 0 : i32
    %c0_i32_1 = arith.constant 0 : i32
    return %1, %c0_i32, %c0_i32_0 : i32, i32, i32
  }
}

</mosaic_0001>

<llo_original>
// kernel: prob_ohem_cross_entropy_2d.1
$region0: #{prob_ohem_cross_entropy_2d.1}
  #allocation0 [shape = 'u32[]', space=smem, size = 0x4, offset = 0x4, fixed_abs, tag = 'smem constant byte address 0x4 - core index']
  #allocation1 [shape = 'u32[144,128]{1,0:T(1,128)}', space=vmem, size = 0x12000, scoped, tag = 'internal scratch']
  %s0 = inlined_call_operand.vmem [shape: f32[2,19,256], index: 0, kind: input, shape index: {}]
  %s1 = inlined_call_operand.vmem [shape: s32[2,1,256], index: 1, kind: input, shape index: {}]
  %s2 = inlined_call_operand.vmem [shape: f32[2,1,256], index: 2, kind: output, shape index: {0}]
  %s3 = inlined_call_operand.vmem [shape: f32[2,8,128], index: 3, kind: output, shape index: {1}]
  %4 = xla_tuple %s2, %s3
  %s5 = sld [smem:[#allocation0]]
  $region49: #{prob_ohem_cross_entropy_2d.1} parent=0
    _
  %s7 = ssub.s32 1, %s5
  %s8 = scalar_select 0, %s7, %s5
  loop: start=0, step=1, limit=4
  $region2: #{prob_ohem_cross_entropy_2d.1} parent=0 // loop_pre_header
    _
  $region3: #{prob_ohem_cross_entropy_2d.1} parent=0 // loop_header
    %s10 = sphi 0, %s14
    %p11 = scmp.ge.s32.totalorder %s10, 4
    %s17 = sphi 0, %s29
    %s18 = sphi 0, %s25
    %s19 = sphi 0, %s17
    %s20 = sphi 0, %s18
    %s21 = sphi 0, %s19
    %s22 = sphi 0, %s20
    %s34 = sphi 0, %s36
    %s37 = sphi 0, %s34
    %s38 = sphi 0, %s37
    %s54 = sphi 0, %s38
    %s62 = sphi 0, %s64
    %s65 = sphi 0, %s62
    %s66 = sphi 0, %s65
    %s82 = sphi 0, %s66
    %s90 = sphi 0, %s92
    %s93 = sphi 0, %s90
    %s94 = sphi 0, %s93
    %s110 = sphi 0, %s94
    %s118 = sphi 0, %s120
    %s121 = sphi 0, %s118
    %s122 = sphi 0, %s121
    %s138 = sphi 0, %s122
  $region4: #{prob_ohem_cross_entropy_2d.1} parent=0 // loop_header_branch
    %13 = sbr.rel (%p11) target = $region8
  $region5: #{prob_ohem_cross_entropy_2d.1} parent=0 // loop_body
    %s15 = ssub.s32 %s10, 1
    %s16 = ssub.s32 %s10, 2
    %s23 = sadd.s32 1, %s18
    %p24 = scmp.ge.s32.totalorder %s23, 2
    %s25 = scalar_select %p24, 0, %s23
    %s26 = sadd.s32 1, %s17
    %s27 = scalar_select %p24, %s26, %s17
    %p28 = scmp.ge.s32.totalorder %s27, 1
    %s29 = scalar_select %p28, 0, %s27
    %s30 = ssub.s32 %s18, %s25
    %s31 = ssub.s32 %s17, %s29
    %s32 = sor.u32 %s30, %s31
    %p33 = scmp.eq.s32.totalorder %s32, 0
    %s35 = sadd.s32 %s34, 1
    %s36 = scalar_select %p33, %s34, %s35
    %p39 = pneg %p33
    %p40 = scmp.eq.s32.totalorder %s10, 1
    %p41 = por %p39, %p40
    %p42 = scmp.ne.s32.totalorder %s34, %s37
    %p43 = scmp.eq.s32.totalorder %s10, 0
    %p44 = por %p42, %p43
    %p45 = scmp.ne.s32.totalorder %s34, %s37
    %p46 = scmp.eq.s32.totalorder %s15, 1
    %p47 = por %p45, %p46
    %p48 = scmp.ne.s32.totalorder %s37, %s38
    %p49 = scmp.eq.s32.totalorder %s15, 0
    %p50 = por %p48, %p49
    %p51 = scmp.ne.s32.totalorder %s37, %s38
    %p52 = scmp.eq.s32.totalorder %s16, 1
    %p53 = por %p51, %p52
    %p55 = scmp.ne.s32.totalorder %s38, %s54
    %p56 = scmp.eq.s32.totalorder %s16, 0
    %p57 = por %p55, %p56
    %s58 = ssub.s32 %s18, %s25
    %s59 = ssub.s32 %s17, %s29
    %s60 = sor.u32 %s58, %s59
    %p61 = scmp.eq.s32.totalorder %s60, 0
    %s63 = sadd.s32 %s62, 1
    %s64 = scalar_select %p61, %s62, %s63
    %p67 = pneg %p61
    %p68 = scmp.eq.s32.totalorder %s10, 1
    %p69 = por %p67, %p68
    %p70 = scmp.ne.s32.totalorder %s62, %s65
    %p71 = scmp.eq.s32.totalorder %s10, 0
    %p72 = por %p70, %p71
    %p73 = scmp.ne.s32.totalorder %s62, %s65
    %p74 = scmp.eq.s32.totalorder %s15, 1
    %p75 = por %p73, %p74
    %p76 = scmp.ne.s32.totalorder %s65, %s66
    %p77 = scmp.eq.s32.totalorder %s15, 0
    %p78 = por %p76, %p77
    %p79 = scmp.ne.s32.totalorder %s65, %s66
    %p80 = scmp.eq.s32.totalorder %s16, 1
    %p81 = por %p79, %p80
    %p83 = scmp.ne.s32.totalorder %s66, %s82
    %p84 = scmp.eq.s32.totalorder %s16, 0
    %p85 = por %p83, %p84
    %s86 = ssub.s32 %s18, %s25
    %s87 = ssub.s32 %s17, %s29
    %s88 = sor.u32 %s86, %s87
    %p89 = scmp.eq.s32.totalorder %s88, 0
    %s91 = sadd.s32 %s90, 1
    %s92 = scalar_select %p89, %s90, %s91
    %p95 = pneg %p89
    %p96 = scmp.eq.s32.totalorder %s10, 1
    %p97 = por %p95, %p96
    %p98 = scmp.ne.s32.totalorder %s90, %s93
    %p99 = scmp.eq.s32.totalorder %s10, 0
    %p100 = por %p98, %p99
    %p101 = scmp.ne.s32.totalorder %s90, %s93
    %p102 = scmp.eq.s32.totalorder %s15, 1
    %p103 = por %p101, %p102
    %p104 = scmp.ne.s32.totalorder %s93, %s94
    %p105 = scmp.eq.s32.totalorder %s15, 0
    %p106 = por %p104, %p105
    %p107 = scmp.ne.s32.totalorder %s93, %s94
    %p108 = scmp.eq.s32.totalorder %s16, 1
    %p109 = por %p107, %p108
    %p111 = scmp.ne.s32.totalorder %s94, %s110
    %p112 = scmp.eq.s32.totalorder %s16, 0
    %p113 = por %p111, %p112
    %s114 = sadd.s32 %s18, %s17
    %s115 = sadd.s32 %s25, %s29
    %s116 = ssub.s32 %s114, %s115
    %p117 = scmp.eq.s32.totalorder %s116, 0
    %s119 = sadd.s32 %s118, 1
    %s120 = scalar_select %p117, %s118, %s119
    %p123 = pneg %p117
    %p124 = scmp.eq.s32.totalorder %s10, 1
    %p125 = por %p123, %p124
    %p126 = scmp.ne.s32.totalorder %s118, %s121
    %p127 = scmp.eq.s32.totalorder %s10, 0
    %p128 = por %p126, %p127
    %p129 = scmp.ne.s32.totalorder %s118, %s121
    %p130 = scmp.eq.s32.totalorder %s15, 1
    %p131 = por %p129, %p130
    %p132 = scmp.ne.s32.totalorder %s121, %s122
    %p133 = scmp.eq.s32.totalorder %s15, 0
    %p134 = por %p132, %p133
    %p135 = scmp.ne.s32.totalorder %s121, %s122
    %p136 = scmp.eq.s32.totalorder %s16, 1
    %p137 = por %p135, %p136
    %p139 = scmp.ne.s32.totalorder %s122, %s138
    %p140 = scmp.eq.s32.totalorder %s16, 0
    %p141 = por %p139, %p140
    %p142 = scmp.le.s32.totalorder 1, %s10
    %p143 = scmp.lt.s32.totalorder %s10, 3
    %p144 = pnand %p142, %p143
    %p145 = pneg %p144
    // Predicated region
    $region9: #{prob_ohem_cross_entropy_2d.1} parent=5 // pred_check
      _
    $region10: #{prob_ohem_cross_entropy_2d.1} parent=5 // pred_check_branch
      %147 = sbr.rel (%p144) target = $region12
    $region11: #{prob_ohem_cross_entropy_2d.1} parent=5 // pred_region
      %s148 = ssub.s32 %s10, 1
    $region12: #{prob_ohem_cross_entropy_2d.1} parent=5 // pred_fallthru
      _
    %p149 = scmp.lt.s32.totalorder %s10, 2
    // Predicated region
    $region13: #{prob_ohem_cross_entropy_2d.1} parent=5 // pred_check
      %p150 = pneg %p149
    $region14: #{prob_ohem_cross_entropy_2d.1} parent=5 // pred_check_branch
      %152 = sbr.rel (%p150) target = $region16
    $region15: #{prob_ohem_cross_entropy_2d.1} parent=5 // pred_region
      // Predicated region
      $region17: #{prob_ohem_cross_entropy_2d.1} parent=15 // pred_check
        %p153 = pneg %p44
      $region18: #{prob_ohem_cross_entropy_2d.1} parent=15 // pred_check_branch
        %155 = sbr.rel (%p153) target = $region20
      $region19: #{prob_ohem_cross_entropy_2d.1} parent=15 // pred_region
        %s156 = smul.u32 2, %s17
        %p157 = scmp.lt.s32.totalorder %s18, 1
        %s158 = scalar_select %p157, %s18, 1
        %p159 = scmp.lt.s32.totalorder %s156, 1
        %s160 = scalar_select %p159, %s156, 1
        %s161 = smul.addr %s158, 6
        %s162 = sadd.s32 %s160, %s161
        %s163 = smul.addr %s162, 8
        %s164 = scalar_lea.vmem %s0, %s163
        %s165 = smul.u32 2, %s17
      $region20: #{prob_ohem_cross_entropy_2d.1} parent=15 // pred_fallthru
        _
      // Predicated region
      $region21: #{prob_ohem_cross_entropy_2d.1} parent=15 // pred_check
        %p166 = pneg %p72
      $region22: #{prob_ohem_cross_entropy_2d.1} parent=15 // pred_check_branch
        %168 = sbr.rel (%p166) target = $region24
      $region23: #{prob_ohem_cross_entropy_2d.1} parent=15 // pred_region
        %s169 = smul.u32 2, %s17
        %p170 = scmp.lt.s32.totalorder %s18, 1
        %s171 = scalar_select %p170, %s18, 1
        %p172 = scmp.lt.s32.totalorder %s169, 1
        %s173 = scalar_select %p172, %s169, 1
        %s174 = smul.addr %s171, 2
        %s175 = sadd.s32 %s173, %s174
        %s176 = scalar_lea.vmem %s1, %s175
        %s177 = smul.u32 2, %s17
      $region24: #{prob_ohem_cross_entropy_2d.1} parent=15 // pred_fallthru
        _
    $region16: #{prob_ohem_cross_entropy_2d.1} parent=5 // pred_fallthru
      _
    %p178 = scmp.le.s32.totalorder 1, %s10
    %p179 = scmp.lt.s32.totalorder %s10, 3
    %p180 = pnand %p178, %p179
    %p181 = pneg %p180
    // Predicated region
    $region25: #{prob_ohem_cross_entropy_2d.1} parent=5 // pred_check
      _
    $region26: #{prob_ohem_cross_entropy_2d.1} parent=5 // pred_check_branch
      %183 = sbr.rel (%p180) target = $region28
    $region27: #{prob_ohem_cross_entropy_2d.1} parent=5 // pred_region
      %s184 = ssub.s32 %s10, 1
      %s185 = smul.u32 2, %s19
      %p186 = scmp.lt.s32.totalorder %s20, 1
      %s187 = scalar_select %p186, %s20, 1
      %p188 = scmp.lt.s32.totalorder %s185, 1
      %s189 = scalar_select %p188, %s185, 1
      %s190 = smul.addr %s187, 6
      %s191 = sadd.s32 %s189, %s190
      %s192 = smul.addr %s191, 8
      %s193 = scalar_lea.vmem %s0, %s192
      %p194 = pneg %p50
      %p195 = pneg %p47
      %s196 = smul.u32 2, %s19
      %p197 = scmp.lt.s32.totalorder %s20, 1
      %s198 = scalar_select %p197, %s20, 1
      %p199 = scmp.lt.s32.totalorder %s196, 1
      %s200 = scalar_select %p199, %s196, 1
      %s201 = smul.addr %s198, 2
      %s202 = sadd.s32 %s200, %s201
      %s203 = scalar_lea.vmem %s1, %s202
      %p204 = pneg %p78
      %p205 = pneg %p75
      %p206 = pneg %p106
      %p207 = pneg %p103
      %s208 = smul.u32 2, %s19
      %p209 = scmp.lt.s32.totalorder %s20, 1
      %s210 = scalar_select %p209, %s20, 1
      %p211 = scmp.lt.s32.totalorder %s208, 1
      %s212 = scalar_select %p211, %s208, 1
      %s213 = smul.addr %s210, 2
      %s214 = sadd.s32 %s212, %s213
      %s215 = scalar_lea.vmem %s2, %s214
      %p216 = pneg %p134
      %p217 = pneg %p131
      %s218 = sadd.s32 %s20, %s19
      %p219 = scmp.lt.s32.totalorder %s218, 1
      %s220 = scalar_select %p219, %s218, 1
      %s221 = smul.addr %s220, 8
      %s222 = scalar_lea.vmem %s3, %s221
      %s223 = smul.u32 2, %s19
      %p224 = scmp.lt.s32.totalorder %s20, 1
      %s225 = scalar_select %p224, %s20, 1
      %p226 = scmp.lt.s32.totalorder %s223, 1
      %s227 = scalar_select %p226, %s223, 1
      %s228 = smul.addr %s225, 6
      %s229 = sadd.s32 %s227, %s228
      %s230 = smul.addr %s229, 8
      %s231 = scalar_lea.vmem %s0, %s230
      %s232 = smul.u32 2, %s19
      %s233 = smul.u32 2, %s19
      %p234 = scmp.lt.s32.totalorder %s20, 1
      %s235 = scalar_select %p234, %s20, 1
      %p236 = scmp.lt.s32.totalorder %s233, 1
      %s237 = scalar_select %p236, %s233, 1
      %s238 = smul.addr %s235, 2
      %s239 = sadd.s32 %s237, %s238
      %s240 = scalar_lea.vmem %s1, %s239
      %s241 = smul.u32 2, %s19
      %s242 = smul.u32 2, %s19
      %p243 = scmp.lt.s32.totalorder %s20, 1
      %s244 = scalar_select %p243, %s20, 1
      %p245 = scmp.lt.s32.totalorder %s242, 1
      %s246 = scalar_select %p245, %s242, 1
      %s247 = smul.addr %s244, 2
      %s248 = sadd.s32 %s246, %s247
      %s249 = scalar_lea.vmem %s2, %s248
      %s250 = smul.u32 2, %s19
      %s251 = sadd.s32 %s20, %s19
      %p252 = scmp.lt.s32.totalorder %s251, 1
      %s253 = scalar_select %p252, %s251, 1
      %s254 = smul.addr %s253, 8
      %s255 = scalar_lea.vmem %s3, %s254
      %s256 = sadd.s32 %s20, %s19
      %v257 = vld [vmem:[%s231] sm:$0xff]
      %v258 = vld [vmem:[%s231 + $0x8] sm:$0xff]
      %v259 = vld [vmem:[%s231 + $0x10] sm:$0xff]
      %v260 = vld [vmem:[%s231 + $0x18] sm:$0xff]
      %v261 = vld [vmem:[%s231 + $0x20] sm:$0x7]
      %v262 = vld [vmem:[%s231 + $0x28] sm:$0x7]
      %v263 = vld [vmem:[%s240] sm:$0x3]
      %vm264 = vcmp.ne.s32.totalorder %v263, 255
      %v265 = vsel %vm264, %v263, 0
      %v266 = vlaneseq
      %v267 = vshrl.u32 %v266, 7
      %v268 = vadd.s32 %v267, 8
      %v269 = vadd.s32 %v267, 16
      %v270 = vlaneseq
      %v271 = vshrl.u32 %v270, 7
      %v272 = vsub.s32 0, %v271
      %v273 = vrot.slane %v265, %v272
      %v274 = vlaneseq
      %v275 = vshrl.u32 %v274, 7
      %v276 = vsub.s32 1, %v275
      %v277 = vrot.slane %v265, %v276
      %vm278 = vcmp.eq.s32.totalorder %v267, %v273
      %vm279 = vcmp.eq.s32.totalorder %v267, %v277
      %vm280 = vcmp.eq.s32.totalorder %v268, %v273
      %vm281 = vcmp.eq.s32.totalorder %v268, %v277
      %vm282 = vcmp.eq.s32.totalorder %v269, %v273
      %vm283 = vcmp.eq.s32.totalorder %v269, %v277
      %vm284 = vcmask 1042432
      %v285 = vsel %vm284, %v261, -inf
      %v286 = vmax.f32 %v257, %v285
      %v287 = vmax.f32 %v286, %v259
      %v288 = vrot.slane %v287, 4
      %v289 = vmax.f32 %v287, %v288
      %v290 = vrot.slane %v289, 2
      %v291 = vmax.f32 %v289, %v290
      %v292 = vrot.slane %v291, 1
      %v293 = vmax.f32 %v291, %v292
      %v294 = vsel %vm284, %v262, -inf
      %v295 = vmax.f32 %v258, %v294
      %v296 = vmax.f32 %v295, %v260
      %v297 = vrot.slane %v296, 4
      %v298 = vmax.f32 %v296, %v297
      %v299 = vrot.slane %v298, 2
      %v300 = vmax.f32 %v298, %v299
      %v301 = vrot.slane %v300, 1
      %v302 = vmax.f32 %v300, %v301
      %v303 = vsub.f32 %v257, %v293
      %v304 = vsub.f32 %v258, %v302
      %v305 = vsub.f32 %v259, %v293
      %v306 = vsub.f32 %v260, %v302
      %v307 = vsub.f32 %v261, %v293
      %v308 = vsub.f32 %v262, %v302
      %v309 = vmul.f32 %v303, 1.442695
      %v310 = vpow.pop %v309
      %v311 = vmul.f32 %v304, 1.442695
      %v312 = vpow.pop %v311
      %v313 = vmul.f32 %v305, 1.442695
      %v314 = vpow.pop %v313
      %v315 = vmul.f32 %v306, 1.442695
      %v316 = vpow.pop %v315
      %v317 = vmul.f32 %v307, 1.442695
      %v318 = vpow.pop %v317
      %v319 = vmul.f32 %v308, 1.442695
      %v320 = vpow.pop %v319
      %v321 = vadd.f32 %v310, %v314
      %v322 = vsel %vm284, %v318, 0.0
      %v323 = vadd.f32 %v321, %v322
      %v324 = vrot.slane %v323, 4
      %v325 = vadd.f32 %v323, %v324
      %v326 = vrot.slane %v325, 2
      %v327 = vadd.f32 %v325, %v326
      %v328 = vrot.slane %v327, 1
      %v329 = vadd.f32 %v327, %v328
      %v330 = vadd.f32 %v312, %v316
      %v331 = vsel %vm284, %v320, 0.0
      %v332 = vadd.f32 %v330, %v331
      %v333 = vrot.slane %v332, 4
      %v334 = vadd.f32 %v332, %v333
      %v335 = vrot.slane %v334, 2
      %v336 = vadd.f32 %v334, %v335
      %v337 = vrot.slane %v336, 1
      %v338 = vadd.f32 %v336, %v337
      %v339 = vsel %vm278, %v257, 0.0
      %v340 = vsel %vm279, %v258, 0.0
      %v341 = vsel %vm280, %v259, 0.0
      %v342 = vsel %vm281, %v260, 0.0
      %v343 = vsel %vm282, %v261, 0.0
      %v344 = vsel %vm283, %v262, 0.0
      %v345 = vadd.f32 %v339, %v341
      %v346 = vsel %vm284, %v343, 0.0
      %v347 = vadd.f32 %v345, %v346
      %v348 = vrot.slane %v347, 4
      %v349 = vadd.f32 %v347, %v348
      %v350 = vrot.slane %v349, 2
      %v351 = vadd.f32 %v349, %v350
      %v352 = vrot.slane %v351, 1
      %v353 = vadd.f32 %v351, %v352
      %v354 = vadd.f32 %v340, %v342
      %v355 = vsel %vm284, %v344, 0.0
      %v356 = vadd.f32 %v354, %v355
      %v357 = vrot.slane %v356, 4
      %v358 = vadd.f32 %v356, %v357
      %v359 = vrot.slane %v358, 2
      %v360 = vadd.f32 %v358, %v359
      %v361 = vrot.slane %v360, 1
      %v362 = vadd.f32 %v360, %v361
      %v363 = vsub.f32 %v293, %v353
      %v364 = vsub.f32 %v302, %v362
      %v365 = vlog2.pop %v329
      %v366 = vmul.f32 %v365, 0.6931472
      %v367 = vlog2.pop %v338
      %v368 = vmul.f32 %v367, 0.6931472
      %v369 = vadd.f32 %v363, %v366
      %v370 = vadd.f32 %v364, %v368
      %v373 = vcombine.low %v369, %v370
      %v375 = vunpack.c.l.s4 1966171168
      %v376 = vunpack.c.0.s8 %v375
      %v377 = vlaneseq
      %v378 = vshrl.u32 %v377, 7
      %v379 = vsub.s32 %v376, %v378
      %v380 = vrot.slane %v373, %v379
      %v382 = vunpack.c.l.s4 1966171168
      %v383 = vunpack.c.0.s8 %v382
      %v384 = vlaneseq
      %v385 = vshrl.u32 %v384, 7
      %v386 = vsub.s32 %v383, %v385
      %v387 = vrot.slane %v380, %v386
      %v389 = vsel %vm264, %v387, 0.0
      %v390 = vlaneseq
      %vm391 = vcmp.ge.s32.totalorder %v390, 0
      %vm392 = vcmp.lt.s32.totalorder %v390, 256
      %vm393 = vmand %vm391, %vm392
      %394 = vst.msk [vmem:[%s249] sm:$0x3] %vm393, %v389
      %vm395 = vcmp.ge.f32.partialorder %v389, 0.51082563
      %vm396 = vmand %vm264, %vm395
      %v397 = vsel %vm264, 1, 0
      %v398 = vcvt.s32.f32 %v397
      %v400 = vlaneseq
      %v401 = vshrl.u32 %v400, 7
      %v402 = vsub.s32 0, %v401
      %v403 = vrot.slane %v398, %v402
      %v404 = vlaneseq
      %v405 = vshrl.u32 %v404, 7
      %v406 = vsub.s32 1, %v405
      %v407 = vrot.slane %v398, %v406
      %vm410 = vcmask 1040384
      %v411 = vsel %vm410, %v403, 0.0
      %v412 = vsel %vm410, %v407, 0.0
      %v413 = vadd.f32 %v411, %v412
      %414 = vadd.xlane.f32.xlu0 %v413
      %v415 = vpop.xlane.xlu0 %414
      %v416 = vrot.slane %v415, 4
      %v417 = vadd.f32 %v415, %v416
      %v418 = vrot.slane %v417, 2
      %v419 = vadd.f32 %v417, %v418
      %v420 = vrot.slane %v419, 1
      %v421 = vadd.f32 %v419, %v420
      %s422 = vtos %v421
      %v423 = vsel %vm396, 1, 0
      %v424 = vcvt.s32.f32 %v423
      %v426 = vlaneseq
      %v427 = vshrl.u32 %v426, 7
      %v428 = vsub.s32 0, %v427
      %v429 = vrot.slane %v424, %v428
      %v430 = vlaneseq
      %v431 = vshrl.u32 %v430, 7
      %v432 = vsub.s32 1, %v431
      %v433 = vrot.slane %v424, %v432
      %v436 = vsel %vm410, %v429, 0.0
      %v437 = vsel %vm410, %v433, 0.0
      %v438 = vadd.f32 %v436, %v437
      %439 = vadd.xlane.f32.xlu0 %v438
      %v440 = vpop.xlane.xlu0 %439
      %v441 = vrot.slane %v440, 4
      %v442 = vadd.f32 %v440, %v441
      %v443 = vrot.slane %v442, 2
      %v444 = vadd.f32 %v442, %v443
      %v445 = vrot.slane %v444, 1
      %v446 = vadd.f32 %v444, %v445
      %s447 = vtos %v446
      %v448 = vsel %vm396, %v389, 0.0
      %v450 = vlaneseq
      %v451 = vshrl.u32 %v450, 7
      %v452 = vsub.s32 0, %v451
      %v453 = vrot.slane %v448, %v452
      %v454 = vlaneseq
      %v455 = vshrl.u32 %v454, 7
      %v456 = vsub.s32 1, %v455
      %v457 = vrot.slane %v448, %v456
      %v460 = vsel %vm410, %v453, 0.0
      %v461 = vsel %vm410, %v457, 0.0
      %v462 = vadd.f32 %v460, %v461
      %463 = vadd.xlane.f32.xlu0 %v462
      %v464 = vpop.xlane.xlu0 %463
      %v465 = vrot.slane %v464, 4
      %v466 = vadd.f32 %v464, %v465
      %v467 = vrot.slane %v466, 2
      %v468 = vadd.f32 %v466, %v467
      %v469 = vrot.slane %v468, 1
      %v470 = vadd.f32 %v468, %v469
      %s471 = vtos %v470
      %v473 = vlaneseq
      %v474 = vshrl.u32 %v473, 7
      %v475 = vsub.s32 0, %v474
      %v476 = vrot.slane %v389, %v475
      %v477 = vlaneseq
      %v478 = vshrl.u32 %v477, 7
      %v479 = vsub.s32 1, %v478
      %v480 = vrot.slane %v389, %v479
      %v483 = vsel %vm410, %v476, 0.0
      %v484 = vsel %vm410, %v480, 0.0
      %v485 = vadd.f32 %v483, %v484
      %486 = vadd.xlane.f32.xlu0 %v485
      %v487 = vpop.xlane.xlu0 %486
      %v488 = vrot.slane %v487, 4
      %v489 = vadd.f32 %v487, %v488
      %v490 = vrot.slane %v489, 2
      %v491 = vadd.f32 %v489, %v490
      %v492 = vrot.slane %v491, 1
      %v493 = vadd.f32 %v491, %v492
      %s494 = vtos %v493
      %vm495 = vcmp.eq.s32.totalorder %v267, 0
      %vm496 = vcmp.eq.s32.totalorder %v267, 1
      %vm497 = vcmp.eq.s32.totalorder %v267, 2
      %vm498 = vcmp.eq.s32.totalorder %v267, 3
      %v499 = vstv %s494
      %v500 = vsel %vm498, %v499, 0.0
      %v501 = vstv %s471
      %v502 = vsel %vm497, %v501, %v500
      %v503 = vstv %s447
      %v504 = vsel %vm496, %v503, %v502
      %v505 = vstv %s422
      %v506 = vsel %vm495, %v505, %v504
      %507 = vst [vmem:[%s255] sm:$0xff] %v506
      %s508 = smul.u32 2, %s19
      %p509 = scmp.lt.s32.totalorder %s20, 1
      %s510 = scalar_select %p509, %s20, 1
      %p511 = scmp.lt.s32.totalorder %s508, 1
      %s512 = scalar_select %p511, %s508, 1
      %s513 = smul.addr %s510, 2
      %s514 = sadd.s32 %s512, %s513
      %s515 = scalar_lea.vmem %s2, %s514
      %s516 = sadd.s32 %s20, %s19
      %p517 = scmp.lt.s32.totalorder %s516, 1
      %s518 = scalar_select %p517, %s516, 1
      %s519 = smul.addr %s518, 8
      %s520 = scalar_lea.vmem %s3, %s519
      // Predicated region
      $region29: #{prob_ohem_cross_entropy_2d.1} parent=27 // pred_check
        %p521 = pneg %p103
      $region30: #{prob_ohem_cross_entropy_2d.1} parent=27 // pred_check_branch
        %523 = sbr.rel (%p521) target = $region32
      $region31: #{prob_ohem_cross_entropy_2d.1} parent=27 // pred_region
        %s524 = smul.u32 2, %s19
      $region32: #{prob_ohem_cross_entropy_2d.1} parent=27 // pred_fallthru
        _
      // Predicated region
      $region33: #{prob_ohem_cross_entropy_2d.1} parent=27 // pred_check
        %p525 = pneg %p131
      $region34: #{prob_ohem_cross_entropy_2d.1} parent=27 // pred_check_branch
        %527 = sbr.rel (%p525) target = $region36
      $region35: #{prob_ohem_cross_entropy_2d.1} parent=27 // pred_region
        %s528 = sadd.s32 %s20, %s19
      $region36: #{prob_ohem_cross_entropy_2d.1} parent=27 // pred_fallthru
        _
    $region28: #{prob_ohem_cross_entropy_2d.1} parent=5 // pred_fallthru
      _
    %p529 = scmp.le.s32.totalorder 2, %s10
    // Predicated region
    $region37: #{prob_ohem_cross_entropy_2d.1} parent=5 // pred_check
      %p530 = pneg %p529
    $region38: #{prob_ohem_cross_entropy_2d.1} parent=5 // pred_check_branch
      %532 = sbr.rel (%p530) target = $region40
    $region39: #{prob_ohem_cross_entropy_2d.1} parent=5 // pred_region
      %s533 = ssub.s32 %s10, 2
      // Predicated region
      $region41: #{prob_ohem_cross_entropy_2d.1} parent=39 // pred_check
        %p534 = pneg %p109
      $region42: #{prob_ohem_cross_entropy_2d.1} parent=39 // pred_check_branch
        %536 = sbr.rel (%p534) target = $region44
      $region43: #{prob_ohem_cross_entropy_2d.1} parent=39 // pred_region
        %s537 = smul.u32 2, %s21
        %p538 = scmp.lt.s32.totalorder %s22, 1
        %s539 = scalar_select %p538, %s22, 1
        %p540 = scmp.lt.s32.totalorder %s537, 1
        %s541 = scalar_select %p540, %s537, 1
        %s542 = smul.addr %s539, 2
        %s543 = sadd.s32 %s541, %s542
        %s544 = scalar_lea.vmem %s2, %s543
      $region44: #{prob_ohem_cross_entropy_2d.1} parent=39 // pred_fallthru
        _
      // Predicated region
      $region45: #{prob_ohem_cross_entropy_2d.1} parent=39 // pred_check
        %p545 = pneg %p137
      $region46: #{prob_ohem_cross_entropy_2d.1} parent=39 // pred_check_branch
        %547 = sbr.rel (%p545) target = $region48
      $region47: #{prob_ohem_cross_entropy_2d.1} parent=39 // pred_region
        %s548 = sadd.s32 %s22, %s21
        %p549 = scmp.lt.s32.totalorder %s548, 1
        %s550 = scalar_select %p549, %s548, 1
        %s551 = smul.addr %s550, 8
        %s552 = scalar_lea.vmem %s3, %s551
      $region48: #{prob_ohem_cross_entropy_2d.1} parent=39 // pred_fallthru
        _
    $region40: #{prob_ohem_cross_entropy_2d.1} parent=5 // pred_fallthru
      _
  $region6: #{prob_ohem_cross_entropy_2d.1} parent=0 // loop_footer
    %s14 = sadd.s32 1, %s10
  $region7: #{prob_ohem_cross_entropy_2d.1} parent=0 // loop_footer_branch
    %9 = sbr.rel target = $region3
  $region8: #{prob_ohem_cross_entropy_2d.1} parent=0 // loop_exit
    _

</llo_original>
